<compile_context>
chip_gen: v6e
topology: v6e:2x2x1
jax: 0.10.0
libtpu: 0.0.40
codegen_flags: <defaults>
</compile_context>

<pallas_src>
import jax
import jax.numpy as jnp
from jax.experimental import pallas as pl
from jax.experimental.pallas import tpu as pltpu

# ---------------- static configuration (module defaults) ----------------------------
N_NODES = 64          # graph nodes (small synthetic graph)
N_INPUT = 24          # Kipfblock n_input
N_HIDDEN = 64         # Kipfblock n_hidden
N_OUTPUT = 6          # mix conv output channels
K_BLOCK = 6           # ChebConv order inside Kipfblock
BN_EPS = 1e-5
BATCH = 8             # number of independent forwards batched per pallas_call


# ---------------------------------- Pallas kernel ------------------------------------
def kipfblock_kernel(p_ref, x_ref, w1_ref, b1_ref, wmix_ref, bmix_ref, y_ref):
    # p_ref   : [K*N, N]   vstack(T_0(S), ..., T_{K-1}(S))   (shared across grid)
    # x_ref   : [1, N, Fin]  this sample's node features
    # w1_ref  : [K*Fin, H]   BN-folded, k-major/feature-minor reshaped ChebConv weights
    # b1_ref  : [1, H]       BN-folded bias
    # wmix_ref: [H, Fout], bmix_ref: [1, Fout]
    x = x_ref[0]                                                        # [N, Fin]

    # All K Chebyshev propagations in a single MXU launch.
    z = jnp.dot(p_ref[...], x, preferred_element_type=jnp.float32)     # [K*N, Fin]

    # Re-lay out as node-major concatenation [N, K*Fin] (sublane slices at 64-row
    # offsets are tile-aligned; the 24-wide lane concat is tiny VPU/XLU work).
    t = jnp.concatenate(
        [z[k * N_NODES:(k + 1) * N_NODES, :] for k in range(K_BLOCK)], axis=1)

    # Fused feature matmul (contraction 144) + folded-BN bias + ReLU.
    h = jnp.dot(t, w1_ref[...], preferred_element_type=jnp.float32) + b1_ref[...]
    h = jnp.maximum(h, 0.0)

    # conv_mix: ChebConv(H -> Fout, K=1) == only the T0 term; dropout (eval) = identity.
    y = jnp.dot(h, wmix_ref[...], preferred_element_type=jnp.float32) + bmix_ref[...]
    y_ref[0] = y.astype(y_ref.dtype)


def kipfblock_forward(p, x, w1r, b1f, wmix, bmix):
    """x: [B, N, Fin] -> y: [B, N, Fout]; p/weights shared across the batch grid."""
    batch = x.shape[0]
    grid_spec = pltpu.PrefetchScalarGridSpec(
        num_scalar_prefetch=0,
        grid=(batch,),
        in_specs=[
            pl.BlockSpec((K_BLOCK * N_NODES, N_NODES), lambda b: (0, 0)),   # P (resident)
            pl.BlockSpec((1, N_NODES, N_INPUT), lambda b: (b, 0, 0)),       # x[b]
            pl.BlockSpec((K_BLOCK * N_INPUT, N_HIDDEN), lambda b: (0, 0)),  # w1 (resident)
            pl.BlockSpec((1, N_HIDDEN), lambda b: (0, 0)),                  # b1 (resident)
            pl.BlockSpec((N_HIDDEN, N_OUTPUT), lambda b: (0, 0)),           # wmix
            pl.BlockSpec((1, N_OUTPUT), lambda b: (0, 0)),                  # bmix
        ],
        out_specs=pl.BlockSpec((1, N_NODES, N_OUTPUT), lambda b: (b, 0, 0)),
    )
    return pl.pallas_call(
        kipfblock_kernel,
        out_shape=jax.ShapeDtypeStruct((batch, N_NODES, N_OUTPUT), jnp.float32),
        grid_spec=grid_spec,
        compiler_params=pltpu.CompilerParams(dimension_semantics=("parallel",)),
    )(p, x, w1r, b1f, wmix, bmix)


# -------------------------------- host-side (static) prep ----------------------------
def build_scaled_laplacian(edge_index, num_nodes):
    """Dense S = -D^{-1/2} A D^{-1/2}  (ChebConv sym norm, lambda_max=2.0)."""
    src, dst = edge_index
    a = jnp.zeros((num_nodes, num_nodes), jnp.float32)
    a = a.at[src, dst].set(1.0)
    a = a.at[dst, src].set(1.0)                       # symmetric, no self loops
    a = a * (1.0 - jnp.eye(num_nodes, dtype=jnp.float32))
    deg = a.sum(axis=1)
    dinv = jnp.where(deg > 0, 1.0 / jnp.sqrt(deg), 0.0)
    return -(dinv[:, None] * a * dinv[None, :])


def build_cheb_basis(s, k_order):
    """vstack(T_0(S), ..., T_{k-1}(S)) : [k*N, N], static graph -> computed once."""
    n = s.shape[0]
    mats = [jnp.eye(n, dtype=jnp.float32), s]
    for _ in range(2, k_order):
        mats.append(2.0 * (s @ mats[-1]) - mats[-2])
    return jnp.concatenate(mats[:k_order], axis=0)


def fold_bn_into_weights(w1, b1, gamma, beta, mean, var):
    """Exact eval-mode BN fold: scale per output channel into w1/b1; reshape w1."""
    scale = gamma * jax.lax.rsqrt(var + BN_EPS)          # [1, H]
    w1f = w1 * scale                                     # [K, Fin, H] * [1, H]
    b1f = (b1 - mean) * scale + beta                     # [1, H]
    w1r = w1f.reshape(K_BLOCK * N_INPUT, N_HIDDEN)       # k-major, feature-minor
    return w1r, b1f


# -------------------------------- pure-JAX reference ---------------------------------
def ref_forward(s, x, w1, b1, gamma, beta, mean, var, wmix, bmix):
    """Un-fused reference of the same forward pass (single sample)."""
    t_prev = x
    acc = t_prev @ w1[0]
    t_cur = s @ x
    acc = acc + t_cur @ w1[1]
    for k in range(2, K_BLOCK):
        t_next = 2.0 * (s @ t_cur) - t_prev
        acc = acc + t_next @ w1[k]
        t_prev, t_cur = t_cur, t_next
    h = acc + b1
    h = (h - mean) / jnp.sqrt(var + BN_EPS) * gamma + beta
    h = jnp.maximum(h, 0.0)
    return h @ wmix + bmix


if __name__ == "__main__":
    key = jax.random.PRNGKey(0)
    keys = jax.random.split(key, 10)

    # deterministic batched node features
    x = jax.random.normal(keys[0], (BATCH, N_NODES, N_INPUT), jnp.float32)

    # deterministic small graph: ring + chord edges
    i = jnp.arange(N_NODES)
    src = jnp.concatenate([i, i])
    dst = jnp.concatenate([(i + 1) % N_NODES, (i + 5) % N_NODES])
    edge_index = jnp.stack([src, dst])
    s = build_scaled_laplacian(edge_index, N_NODES)
    p = build_cheb_basis(s, K_BLOCK)                    # [K*N, N]

    # deterministic parameters (shapes from the module __init__)
    w1 = jax.random.normal(keys[1], (K_BLOCK, N_INPUT, N_HIDDEN), jnp.float32) * 0.1
    b1 = jax.random.normal(keys[2], (1, N_HIDDEN), jnp.float32) * 0.1
    gamma = 1.0 + 0.1 * jax.random.normal(keys[3], (1, N_HIDDEN), jnp.float32)
    beta = 0.1 * jax.random.normal(keys[4], (1, N_HIDDEN), jnp.float32)
    run_mean = 0.1 * jax.random.normal(keys[5], (1, N_HIDDEN), jnp.float32)
    run_var = jnp.abs(1.0 + 0.1 * jax.random.normal(keys[6], (1, N_HIDDEN), jnp.float32))
    wmix = jax.random.normal(keys[7], (N_HIDDEN, N_OUTPUT), jnp.float32) * 0.1
    bmix = 0.1 * jax.random.normal(keys[8], (1, N_OUTPUT), jnp.float32)

    # fold eval-mode BN into the ChebConv weights (inference-time constants)
    w1r, b1f = fold_bn_into_weights(w1, b1, gamma, beta, run_mean, run_var)

    y = kipfblock_forward(p, x, w1r, b1f, wmix, bmix)
    y = jax.block_until_ready(y)

    y_ref = jax.vmap(
        lambda xb: ref_forward(s, xb, w1, b1, gamma, beta, run_mean, run_var, wmix, bmix)
    )(x)

    assert y.shape == (BATCH, N_NODES, N_OUTPUT)
    assert jnp.allclose(y, y_ref, rtol=1e-4, atol=1e-4), "mismatch vs pure-JAX reference"

    print("KERNEL_OK")
</pallas_src>

<mosaic_0001>
module attributes {stable_mosaic.version = 11 : i64} {
  func.func @kipfblock_kernel(%arg0: i32, %arg1: memref<384x64xf32, #tpu.memory_space<vmem>>, %arg2: memref<1x64x24xf32, #tpu.memory_space<vmem>>, %arg3: memref<144x64xf32, #tpu.memory_space<vmem>>, %arg4: memref<1x64xf32, #tpu.memory_space<vmem>>, %arg5: memref<64x6xf32, #tpu.memory_space<vmem>>, %arg6: memref<1x6xf32, #tpu.memory_space<vmem>>, %arg7: memref<1x64x6xf32, #tpu.memory_space<vmem>>) attributes {dimension_semantics = [#tpu.dimension_semantics<parallel>], iteration_bounds = array<i64: 8>, scalar_prefetch = 0 : i64, scratch_operands = 0 : i64, tpu.core_type = #tpu.core_type<tc>, window_params = [{pipeline_mode = #tpu.pipeline_mode<synchronous>, transform_indices = @transform_0, window_bounds = array<i64: 384, 64>}, {transform_indices = @transform_1, window_bounds = array<i64: 1, 64, 24>}, {pipeline_mode = #tpu.pipeline_mode<synchronous>, transform_indices = @transform_2, window_bounds = array<i64: 144, 64>}, {pipeline_mode = #tpu.pipeline_mode<synchronous>, transform_indices = @transform_3, window_bounds = array<i64: 1, 64>}, {pipeline_mode = #tpu.pipeline_mode<synchronous>, transform_indices = @transform_4, window_bounds = array<i64: 64, 6>}, {pipeline_mode = #tpu.pipeline_mode<synchronous>, transform_indices = @transform_5, window_bounds = array<i64: 1, 6>}, {transform_indices = @transform_6, window_bounds = array<i64: 1, 64, 6>}]} {
    %c0 = arith.constant 0 : index
    %c0_0 = arith.constant 0 : index
    %c0_1 = arith.constant 0 : index
    %0 = vector.load %arg2[%c0, %c0_0, %c0_1] : memref<1x64x24xf32, #tpu.memory_space<vmem>>, vector<1x64x24xf32>
    %1 = vector.shape_cast %0 : vector<1x64x24xf32> to vector<64x24xf32>
    %c0_2 = arith.constant 0 : index
    %c0_3 = arith.constant 0 : index
    %2 = vector.load %arg1[%c0_2, %c0_3] : memref<384x64xf32, #tpu.memory_space<vmem>>, vector<384x64xf32>
    %cst = arith.constant dense<0.000000e+00> : vector<384x24xf32>
    %3 = tpu.matmul %2, %1, %cst {dimension_numbers = #tpu.dot_dimension_numbers<[1], [0], [0], [1], [0, 0, 1, 1], [], []>} : vector<384x64xf32>, vector<64x24xf32>, vector<384x24xf32> -> vector<384x24xf32>
    %4 = vector.extract_strided_slice %3 {offsets = [0, 0], sizes = [64, 24], strides = [1, 1]} : vector<384x24xf32> to vector<64x24xf32>
    %5 = vector.extract_strided_slice %3 {offsets = [64, 0], sizes = [64, 24], strides = [1, 1]} : vector<384x24xf32> to vector<64x24xf32>
    %6 = vector.extract_strided_slice %3 {offsets = [128, 0], sizes = [64, 24], strides = [1, 1]} : vector<384x24xf32> to vector<64x24xf32>
    %7 = vector.extract_strided_slice %3 {offsets = [192, 0], sizes = [64, 24], strides = [1, 1]} : vector<384x24xf32> to vector<64x24xf32>
    %8 = vector.extract_strided_slice %3 {offsets = [256, 0], sizes = [64, 24], strides = [1, 1]} : vector<384x24xf32> to vector<64x24xf32>
    %9 = vector.extract_strided_slice %3 {offsets = [320, 0], sizes = [64, 24], strides = [1, 1]} : vector<384x24xf32> to vector<64x24xf32>
    %10 = tpu.concatenate %4, %5, %6, %7, %8, %9 in 1 : vector<64x24xf32>, vector<64x24xf32>, vector<64x24xf32>, vector<64x24xf32>, vector<64x24xf32>, vector<64x24xf32> -> vector<64x144xf32>
    %c0_4 = arith.constant 0 : index
    %c0_5 = arith.constant 0 : index
    %11 = vector.load %arg3[%c0_4, %c0_5] : memref<144x64xf32, #tpu.memory_space<vmem>>, vector<144x64xf32>
    %cst_6 = arith.constant dense<0.000000e+00> : vector<64x64xf32>
    %12 = tpu.matmul %10, %11, %cst_6 {dimension_numbers = #tpu.dot_dimension_numbers<[1], [0], [0], [1], [0, 0, 1, 1], [], []>} : vector<64x144xf32>, vector<144x64xf32>, vector<64x64xf32> -> vector<64x64xf32>
    %c0_7 = arith.constant 0 : index
    %c0_8 = arith.constant 0 : index
    %13 = vector.load %arg4[%c0_7, %c0_8] : memref<1x64xf32, #tpu.memory_space<vmem>>, vector<1x64xf32>
    %14 = vector.broadcast %13 : vector<1x64xf32> to vector<64x64xf32>
    %15 = arith.addf %12, %14 : vector<64x64xf32>
    %cst_9 = arith.constant 0.000000e+00 : f32
    %16 = vector.broadcast %cst_9 : f32 to vector<64x64xf32>
    %17 = arith.maximumf %15, %16 : vector<64x64xf32>
    %c0_10 = arith.constant 0 : index
    %c0_11 = arith.constant 0 : index
    %18 = vector.load %arg5[%c0_10, %c0_11] : memref<64x6xf32, #tpu.memory_space<vmem>>, vector<64x6xf32>
    %cst_12 = arith.constant dense<0.000000e+00> : vector<64x6xf32>
    %19 = tpu.matmul %17, %18, %cst_12 {dimension_numbers = #tpu.dot_dimension_numbers<[1], [0], [0], [1], [0, 0, 1, 1], [], []>} : vector<64x64xf32>, vector<64x6xf32>, vector<64x6xf32> -> vector<64x6xf32>
    %c0_13 = arith.constant 0 : index
    %c0_14 = arith.constant 0 : index
    %20 = vector.load %arg6[%c0_13, %c0_14] : memref<1x6xf32, #tpu.memory_space<vmem>>, vector<1x6xf32>
    %21 = vector.broadcast %20 : vector<1x6xf32> to vector<64x6xf32>
    %22 = arith.addf %19, %21 : vector<64x6xf32>
    %c0_15 = arith.constant 0 : index
    %c0_16 = arith.constant 0 : index
    %c0_17 = arith.constant 0 : index
    %23 = vector.load %arg7[%c0_15, %c0_16, %c0_17] : memref<1x64x6xf32, #tpu.memory_space<vmem>>, vector<1x64x6xf32>
    %24 = vector.shape_cast %23 : vector<1x64x6xf32> to vector<64x6xf32>
    %25 = vector.shape_cast %22 : vector<64x6xf32> to vector<1x64x6xf32>
    tpu.vector_store %arg7[%c0_15, %c0_16, %c0_17], %25 {strides = array<i32>} : memref<1x64x6xf32, #tpu.memory_space<vmem>>, vector<1x64x6xf32>,
    return
  }
  func.func @transform_0(%arg0: i32) -> (i32, i32) {
    %c0_i32 = arith.constant 0 : i32
    %c0_i32_0 = arith.constant 0 : i32
    %c0_i32_1 = arith.constant 0 : i32
    return %c0_i32, %c0_i32_0 : i32, i32
  }
  func.func @transform_1(%arg0: i32) -> (i32, i32, i32) {
    %c0_i32 = arith.constant 0 : i32
    %c0_i32_0 = arith.constant 0 : i32
    %c0_i32_1 = arith.constant 0 : i32
    return %arg0, %c0_i32, %c0_i32_0 : i32, i32, i32
  }
  func.func @transform_2(%arg0: i32) -> (i32, i32) {
    %c0_i32 = arith.constant 0 : i32
    %c0_i32_0 = arith.constant 0 : i32
    %c0_i32_1 = arith.constant 0 : i32
    return %c0_i32, %c0_i32_0 : i32, i32
  }
  func.func @transform_3(%arg0: i32) -> (i32, i32) {
    %c0_i32 = arith.constant 0 : i32
    %c0_i32_0 = arith.constant 0 : i32
    %c0_i32_1 = arith.constant 0 : i32
    return %c0_i32, %c0_i32_0 : i32, i32
  }
  func.func @transform_4(%arg0: i32) -> (i32, i32) {
    %c0_i32 = arith.constant 0 : i32
    %c0_i32_0 = arith.constant 0 : i32
    %c0_i32_1 = arith.constant 0 : i32
    return %c0_i32, %c0_i32_0 : i32, i32
  }
  func.func @transform_5(%arg0: i32) -> (i32, i32) {
    %c0_i32 = arith.constant 0 : i32
    %c0_i32_0 = arith.constant 0 : i32
    %c0_i32_1 = arith.constant 0 : i32
    return %c0_i32, %c0_i32_0 : i32, i32
  }
  func.func @transform_6(%arg0: i32) -> (i32, i32, i32) {
    %c0_i32 = arith.constant 0 : i32
    %c0_i32_0 = arith.constant 0 : i32
    %c0_i32_1 = arith.constant 0 : i32
    return %arg0, %c0_i32, %c0_i32_0 : i32, i32, i32
  }
}

</mosaic_0001>

<llo_original>
// kernel: tpu_custom_call.1
$region0: #{tpu_custom_call.1}
  #allocation0 [shape = 'u32[]', space=smem, size = 0x4, offset = 0x4, fixed_abs, tag = 'smem constant byte address 0x4 - core index']
  #allocation1 [shape = 'u32[144,128]{1,0:T(1,128)}', space=vmem, size = 0x12000, scoped, tag = 'internal scratch']
  %s0 = inlined_call_operand.vmem [shape: f32[384,64], index: 0, kind: input, shape index: {}]
  %s1 = inlined_call_operand.vmem [shape: f32[8,64,24], index: 1, kind: input, shape index: {}]
  %s2 = inlined_call_operand.vmem [shape: f32[144,64], index: 2, kind: input, shape index: {}]
  %s3 = inlined_call_operand.vmem [shape: f32[1,64], index: 3, kind: input, shape index: {}]
  %s4 = inlined_call_operand.vmem [shape: f32[64,6], index: 4, kind: input, shape index: {}]
  %s5 = inlined_call_operand.vmem [shape: f32[1,6], index: 5, kind: input, shape index: {}]
  %s6 = inlined_call_operand.vmem [shape: f32[8,64,6], index: 6, kind: output, shape index: {}]
  %s7 = sld [smem:[#allocation0]]
  $region57: #{tpu_custom_call.1} parent=0
    _
  %s9 = ssub.s32 1, %s7
  %s10 = scalar_select 0, %s9, %s7
  loop: start=0, step=1, limit=10
  $region2: #{tpu_custom_call.1} parent=0 // loop_pre_header
    _
  $region3: #{tpu_custom_call.1} parent=0 // loop_header
    %s12 = sphi 0, %s16
    %p13 = scmp.ge.s32.totalorder %s12, 10
    %s20 = sphi 0, %s20
    %s22 = sphi 0, %s20
    %s23 = sphi 0, %s22
    %s37 = sphi 0, %s23
    %s43 = sphi 0, %s45
    %s46 = sphi 0, %s43
    %s47 = sphi 0, %s46
    %s63 = sphi 0, %s47
    %s67 = sphi 0, %s67
    %s69 = sphi 0, %s67
    %s70 = sphi 0, %s69
    %s84 = sphi 0, %s70
    %s88 = sphi 0, %s88
    %s90 = sphi 0, %s88
    %s91 = sphi 0, %s90
    %s105 = sphi 0, %s91
    %s109 = sphi 0, %s109
    %s111 = sphi 0, %s109
    %s112 = sphi 0, %s111
    %s126 = sphi 0, %s112
    %s130 = sphi 0, %s130
    %s132 = sphi 0, %s130
    %s133 = sphi 0, %s132
    %s147 = sphi 0, %s133
    %s153 = sphi 0, %s155
    %s156 = sphi 0, %s153
    %s157 = sphi 0, %s156
    %s173 = sphi 0, %s157
  $region4: #{tpu_custom_call.1} parent=0 // loop_header_branch
    %15 = sbr.rel (%p13) target = $region8
  $region5: #{tpu_custom_call.1} parent=0 // loop_body
    %s17 = ssub.s32 %s12, 1
    %s18 = ssub.s32 %s12, 2
    %s19 = sadd.s32 %s12, 1
    %s21 = sadd.s32 %s20, 1
    %p24 = scmp.eq.s32.totalorder %s12, 7
    %p25 = scmp.ne.s32.totalorder %s20, %s22
    %p26 = scmp.eq.s32.totalorder %s12, 0
    %p27 = por %p25, %p26
    %p28 = scmp.ne.s32.totalorder %s20, %s22
    %p29 = scmp.eq.s32.totalorder %s17, 7
    %p30 = por %p28, %p29
    %p31 = scmp.ne.s32.totalorder %s22, %s23
    %p32 = scmp.eq.s32.totalorder %s17, 0
    %p33 = por %p31, %p32
    %p34 = scmp.ne.s32.totalorder %s22, %s23
    %p35 = scmp.eq.s32.totalorder %s18, 7
    %p36 = por %p34, %p35
    %p38 = scmp.ne.s32.totalorder %s23, %s37
    %p39 = scmp.eq.s32.totalorder %s18, 0
    %p40 = por %p38, %p39
    %s41 = ssub.s32 %s12, %s19
    %p42 = scmp.eq.s32.totalorder %s41, 0
    %s44 = sadd.s32 %s43, 1
    %s45 = scalar_select %p42, %s43, %s44
    %p48 = pneg %p42
    %p49 = scmp.eq.s32.totalorder %s12, 7
    %p50 = por %p48, %p49
    %p51 = scmp.ne.s32.totalorder %s43, %s46
    %p52 = scmp.eq.s32.totalorder %s12, 0
    %p53 = por %p51, %p52
    %p54 = scmp.ne.s32.totalorder %s43, %s46
    %p55 = scmp.eq.s32.totalorder %s17, 7
    %p56 = por %p54, %p55
    %p57 = scmp.ne.s32.totalorder %s46, %s47
    %p58 = scmp.eq.s32.totalorder %s17, 0
    %p59 = por %p57, %p58
    %p60 = scmp.ne.s32.totalorder %s46, %s47
    %p61 = scmp.eq.s32.totalorder %s18, 7
    %p62 = por %p60, %p61
    %p64 = scmp.ne.s32.totalorder %s47, %s63
    %p65 = scmp.eq.s32.totalorder %s18, 0
    %p66 = por %p64, %p65
    %s68 = sadd.s32 %s67, 1
    %p71 = scmp.eq.s32.totalorder %s12, 7
    %p72 = scmp.ne.s32.totalorder %s67, %s69
    %p73 = scmp.eq.s32.totalorder %s12, 0
    %p74 = por %p72, %p73
    %p75 = scmp.ne.s32.totalorder %s67, %s69
    %p76 = scmp.eq.s32.totalorder %s17, 7
    %p77 = por %p75, %p76
    %p78 = scmp.ne.s32.totalorder %s69, %s70
    %p79 = scmp.eq.s32.totalorder %s17, 0
    %p80 = por %p78, %p79
    %p81 = scmp.ne.s32.totalorder %s69, %s70
    %p82 = scmp.eq.s32.totalorder %s18, 7
    %p83 = por %p81, %p82
    %p85 = scmp.ne.s32.totalorder %s70, %s84
    %p86 = scmp.eq.s32.totalorder %s18, 0
    %p87 = por %p85, %p86
    %s89 = sadd.s32 %s88, 1
    %p92 = scmp.eq.s32.totalorder %s12, 7
    %p93 = scmp.ne.s32.totalorder %s88, %s90
    %p94 = scmp.eq.s32.totalorder %s12, 0
    %p95 = por %p93, %p94
    %p96 = scmp.ne.s32.totalorder %s88, %s90
    %p97 = scmp.eq.s32.totalorder %s17, 7
    %p98 = por %p96, %p97
    %p99 = scmp.ne.s32.totalorder %s90, %s91
    %p100 = scmp.eq.s32.totalorder %s17, 0
    %p101 = por %p99, %p100
    %p102 = scmp.ne.s32.totalorder %s90, %s91
    %p103 = scmp.eq.s32.totalorder %s18, 7
    %p104 = por %p102, %p103
    %p106 = scmp.ne.s32.totalorder %s91, %s105
    %p107 = scmp.eq.s32.totalorder %s18, 0
    %p108 = por %p106, %p107
    %s110 = sadd.s32 %s109, 1
    %p113 = scmp.eq.s32.totalorder %s12, 7
    %p114 = scmp.ne.s32.totalorder %s109, %s111
    %p115 = scmp.eq.s32.totalorder %s12, 0
    %p116 = por %p114, %p115
    %p117 = scmp.ne.s32.totalorder %s109, %s111
    %p118 = scmp.eq.s32.totalorder %s17, 7
    %p119 = por %p117, %p118
    %p120 = scmp.ne.s32.totalorder %s111, %s112
    %p121 = scmp.eq.s32.totalorder %s17, 0
    %p122 = por %p120, %p121
    %p123 = scmp.ne.s32.totalorder %s111, %s112
    %p124 = scmp.eq.s32.totalorder %s18, 7
    %p125 = por %p123, %p124
    %p127 = scmp.ne.s32.totalorder %s112, %s126
    %p128 = scmp.eq.s32.totalorder %s18, 0
    %p129 = por %p127, %p128
    %s131 = sadd.s32 %s130, 1
    %p134 = scmp.eq.s32.totalorder %s12, 7
    %p135 = scmp.ne.s32.totalorder %s130, %s132
    %p136 = scmp.eq.s32.totalorder %s12, 0
    %p137 = por %p135, %p136
    %p138 = scmp.ne.s32.totalorder %s130, %s132
    %p139 = scmp.eq.s32.totalorder %s17, 7
    %p140 = por %p138, %p139
    %p141 = scmp.ne.s32.totalorder %s132, %s133
    %p142 = scmp.eq.s32.totalorder %s17, 0
    %p143 = por %p141, %p142
    %p144 = scmp.ne.s32.totalorder %s132, %s133
    %p145 = scmp.eq.s32.totalorder %s18, 7
    %p146 = por %p144, %p145
    %p148 = scmp.ne.s32.totalorder %s133, %s147
    %p149 = scmp.eq.s32.totalorder %s18, 0
    %p150 = por %p148, %p149
    %s151 = ssub.s32 %s12, %s19
    %p152 = scmp.eq.s32.totalorder %s151, 0
    %s154 = sadd.s32 %s153, 1
    %s155 = scalar_select %p152, %s153, %s154
    %p158 = pneg %p152
    %p159 = scmp.eq.s32.totalorder %s12, 7
    %p160 = por %p158, %p159
    %p161 = scmp.ne.s32.totalorder %s153, %s156
    %p162 = scmp.eq.s32.totalorder %s12, 0
    %p163 = por %p161, %p162
    %p164 = scmp.ne.s32.totalorder %s153, %s156
    %p165 = scmp.eq.s32.totalorder %s17, 7
    %p166 = por %p164, %p165
    %p167 = scmp.ne.s32.totalorder %s156, %s157
    %p168 = scmp.eq.s32.totalorder %s17, 0
    %p169 = por %p167, %p168
    %p170 = scmp.ne.s32.totalorder %s156, %s157
    %p171 = scmp.eq.s32.totalorder %s18, 7
    %p172 = por %p170, %p171
    %p174 = scmp.ne.s32.totalorder %s157, %s173
    %p175 = scmp.eq.s32.totalorder %s18, 0
    %p176 = por %p174, %p175
    %p177 = scmp.le.s32.totalorder 1, %s12
    %p178 = scmp.lt.s32.totalorder %s12, 9
    %p179 = pnand %p177, %p178
    %p180 = pneg %p179
    // Predicated region
    $region9: #{tpu_custom_call.1} parent=5 // pred_check
      _
    $region10: #{tpu_custom_call.1} parent=5 // pred_check_branch
      %182 = sbr.rel (%p179) target = $region12
    $region11: #{tpu_custom_call.1} parent=5 // pred_region
      %s183 = ssub.s32 %s12, 1
      // Predicated region
      $region13: #{tpu_custom_call.1} parent=11 // pred_check
        %p184 = pneg %p33
      $region14: #{tpu_custom_call.1} parent=11 // pred_check_branch
        %186 = sbr.rel (%p184) target = $region16
      $region15: #{tpu_custom_call.1} parent=11 // pred_region
        _
      $region16: #{tpu_custom_call.1} parent=11 // pred_fallthru
        _
      // Predicated region
      $region17: #{tpu_custom_call.1} parent=11 // pred_check
        %p187 = pneg %p80
      $region18: #{tpu_custom_call.1} parent=11 // pred_check_branch
        %189 = sbr.rel (%p187) target = $region20
      $region19: #{tpu_custom_call.1} parent=11 // pred_region
        _
      $region20: #{tpu_custom_call.1} parent=11 // pred_fallthru
        _
      // Predicated region
      $region21: #{tpu_custom_call.1} parent=11 // pred_check
        %p190 = pneg %p101
      $region22: #{tpu_custom_call.1} parent=11 // pred_check_branch
        %192 = sbr.rel (%p190) target = $region24
      $region23: #{tpu_custom_call.1} parent=11 // pred_region
        _
      $region24: #{tpu_custom_call.1} parent=11 // pred_fallthru
        _
      // Predicated region
      $region25: #{tpu_custom_call.1} parent=11 // pred_check
        %p193 = pneg %p122
      $region26: #{tpu_custom_call.1} parent=11 // pred_check_branch
        %195 = sbr.rel (%p193) target = $region28
      $region27: #{tpu_custom_call.1} parent=11 // pred_region
        _
      $region28: #{tpu_custom_call.1} parent=11 // pred_fallthru
        _
      // Predicated region
      $region29: #{tpu_custom_call.1} parent=11 // pred_check
        %p196 = pneg %p143
      $region30: #{tpu_custom_call.1} parent=11 // pred_check_branch
        %198 = sbr.rel (%p196) target = $region32
      $region31: #{tpu_custom_call.1} parent=11 // pred_region
        _
      $region32: #{tpu_custom_call.1} parent=11 // pred_fallthru
        _
    $region12: #{tpu_custom_call.1} parent=5 // pred_fallthru
      _
    %p199 = scmp.lt.s32.totalorder %s12, 8
    // Predicated region
    $region33: #{tpu_custom_call.1} parent=5 // pred_check
      %p200 = pneg %p199
    $region34: #{tpu_custom_call.1} parent=5 // pred_check_branch
      %202 = sbr.rel (%p200) target = $region36
    $region35: #{tpu_custom_call.1} parent=5 // pred_region
      // Predicated region
      $region37: #{tpu_custom_call.1} parent=35 // pred_check
        %p203 = pneg %p53
      $region38: #{tpu_custom_call.1} parent=35 // pred_check_branch
        %205 = sbr.rel (%p203) target = $region40
      $region39: #{tpu_custom_call.1} parent=35 // pred_region
        %p206 = scmp.lt.s32.totalorder %s12, 7
        %s207 = scalar_select %p206, %s12, 7
        %s208 = smul.addr %s207, 8
        %s209 = smul.addr %s208, 8
        %s210 = scalar_lea.vmem %s1, %s209
      $region40: #{tpu_custom_call.1} parent=35 // pred_fallthru
        _
    $region36: #{tpu_custom_call.1} parent=5 // pred_fallthru
      _
    %p211 = scmp.le.s32.totalorder 1, %s12
    %p212 = scmp.lt.s32.totalorder %s12, 9
    %p213 = pnand %p211, %p212
    %p214 = pneg %p213
    // Predicated region
    $region41: #{tpu_custom_call.1} parent=5 // pred_check
      _
    $region42: #{tpu_custom_call.1} parent=5 // pred_check_branch
      %216 = sbr.rel (%p213) target = $region44
    $region43: #{tpu_custom_call.1} parent=5 // pred_region
      %s217 = ssub.s32 %s12, 1
      %p218 = pneg %p33
      %p219 = pneg %p30
      %p220 = scmp.lt.s32.totalorder %s17, 7
      %s221 = scalar_select %p220, %s17, 7
      %s222 = smul.addr %s221, 8
      %s223 = smul.addr %s222, 8
      %s224 = scalar_lea.vmem %s1, %s223
      %p225 = pneg %p59
      %p226 = pneg %p56
      %p227 = pneg %p80
      %p228 = pneg %p77
      %p229 = pneg %p101
      %p230 = pneg %p98
      %p231 = pneg %p122
      %p232 = pneg %p119
      %p233 = pneg %p143
      %p234 = pneg %p140
      %p235 = pneg %p169
      %p236 = pneg %p166
      %p237 = scmp.lt.s32.totalorder %s17, 7
      %s238 = scalar_select %p237, %s17, 7
      %s239 = smul.addr %s238, 8
      %s240 = smul.addr %s239, 8
      %s241 = scalar_lea.vmem %s6, %s240
      %p242 = scmp.lt.s32.totalorder %s17, 7
      %s243 = scalar_select %p242, %s17, 7
      %s244 = smul.addr %s243, 8
      %s245 = smul.addr %s244, 8
      %s246 = scalar_lea.vmem %s1, %s245
      %p247 = scmp.lt.s32.totalorder %s17, 7
      %s248 = scalar_select %p247, %s17, 7
      %s249 = smul.addr %s248, 8
      %s250 = smul.addr %s249, 8
      %s251 = scalar_lea.vmem %s6, %s250
      %v252 = vld [vmem:[%s246] sm:$0xff]
      %v253 = vld [vmem:[%s246 + $0x8] sm:$0xff]
      %v254 = vld [vmem:[%s246 + $0x10] sm:$0xff]
      %v255 = vld [vmem:[%s246 + $0x18] sm:$0xff]
      %v256 = vld [vmem:[%s246 + $0x20] sm:$0xff]
      %v257 = vld [vmem:[%s246 + $0x28] sm:$0xff]
      %v258 = vld [vmem:[%s246 + $0x30] sm:$0xff]
      %v259 = vld [vmem:[%s246 + $0x38] sm:$0xff]
      %v260 = vld [vmem:[%s0] sm:$0xff]
      %v261 = vld [vmem:[%s0 + $0x8] sm:$0xff]
      %v262 = vld [vmem:[%s0 + $0x10] sm:$0xff]
      %v263 = vld [vmem:[%s0 + $0x18] sm:$0xff]
      %v264 = vld [vmem:[%s0 + $0x20] sm:$0xff]
      %v265 = vld [vmem:[%s0 + $0x28] sm:$0xff]
      %v266 = vld [vmem:[%s0 + $0x30] sm:$0xff]
      %v267 = vld [vmem:[%s0 + $0x38] sm:$0xff]
      %v268 = vld [vmem:[%s0 + $0x40] sm:$0xff]
      %v269 = vld [vmem:[%s0 + $0x48] sm:$0xff]
      %v270 = vld [vmem:[%s0 + $0x50] sm:$0xff]
      %v271 = vld [vmem:[%s0 + $0x58] sm:$0xff]
      %v272 = vld [vmem:[%s0 + $0x60] sm:$0xff]
      %v273 = vld [vmem:[%s0 + $0x68] sm:$0xff]
      %v274 = vld [vmem:[%s0 + $0x70] sm:$0xff]
      %v275 = vld [vmem:[%s0 + $0x78] sm:$0xff]
      %v276 = vld [vmem:[%s0 + $0x80] sm:$0xff]
      %v277 = vld [vmem:[%s0 + $0x88] sm:$0xff]
      %v278 = vld [vmem:[%s0 + $0x90] sm:$0xff]
      %v279 = vld [vmem:[%s0 + $0x98] sm:$0xff]
      %v280 = vld [vmem:[%s0 + $0xa0] sm:$0xff]
      %v281 = vld [vmem:[%s0 + $0xa8] sm:$0xff]
      %v282 = vld [vmem:[%s0 + $0xb0] sm:$0xff]
      %v283 = vld [vmem:[%s0 + $0xb8] sm:$0xff]
      %v284 = vld [vmem:[%s0 + $0xc0] sm:$0xff]
      %v285 = vld [vmem:[%s0 + $0xc8] sm:$0xff]
      %v286 = vld [vmem:[%s0 + $0xd0] sm:$0xff]
      %v287 = vld [vmem:[%s0 + $0xd8] sm:$0xff]
      %v288 = vld [vmem:[%s0 + $0xe0] sm:$0xff]
      %v289 = vld [vmem:[%s0 + $0xe8] sm:$0xff]
      %v290 = vld [vmem:[%s0 + $0xf0] sm:$0xff]
      %v291 = vld [vmem:[%s0 + $0xf8] sm:$0xff]
      %v292 = vld [vmem:[%s0 + $0x100] sm:$0xff]
      %v293 = vld [vmem:[%s0 + $0x108] sm:$0xff]
      %v294 = vld [vmem:[%s0 + $0x110] sm:$0xff]
      %v295 = vld [vmem:[%s0 + $0x118] sm:$0xff]
      %v296 = vld [vmem:[%s0 + $0x120] sm:$0xff]
      %v297 = vld [vmem:[%s0 + $0x128] sm:$0xff]
      %v298 = vld [vmem:[%s0 + $0x130] sm:$0xff]
      %v299 = vld [vmem:[%s0 + $0x138] sm:$0xff]
      %v300 = vld [vmem:[%s0 + $0x140] sm:$0xff]
      %v301 = vld [vmem:[%s0 + $0x148] sm:$0xff]
      %v302 = vld [vmem:[%s0 + $0x150] sm:$0xff]
      %v303 = vld [vmem:[%s0 + $0x158] sm:$0xff]
      %v304 = vld [vmem:[%s0 + $0x160] sm:$0xff]
      %v305 = vld [vmem:[%s0 + $0x168] sm:$0xff]
      %v306 = vld [vmem:[%s0 + $0x170] sm:$0xff]
      %v307 = vld [vmem:[%s0 + $0x178] sm:$0xff]
      %vm308 = vcmask 523264
      %v310 = vsel %vm308, %v260, 0
      %v313 = vsel %vm308, %v261, 0
      %v316 = vsel %vm308, %v262, 0
      %v319 = vsel %vm308, %v263, 0
      %v322 = vsel %vm308, %v264, 0
      %v325 = vsel %vm308, %v265, 0
      %v328 = vsel %vm308, %v266, 0
      %v331 = vsel %vm308, %v267, 0
      %v334 = vsel %vm308, %v268, 0
      %v337 = vsel %vm308, %v269, 0
      %v340 = vsel %vm308, %v270, 0
      %v343 = vsel %vm308, %v271, 0
      %v346 = vsel %vm308, %v272, 0
      %v349 = vsel %vm308, %v273, 0
      %v352 = vsel %vm308, %v274, 0
      %v355 = vsel %vm308, %v275, 0
      %v358 = vsel %vm308, %v276, 0
      %v361 = vsel %vm308, %v277, 0
      %v364 = vsel %vm308, %v278, 0
      %v367 = vsel %vm308, %v279, 0
      %v370 = vsel %vm308, %v280, 0
      %v373 = vsel %vm308, %v281, 0
      %v376 = vsel %vm308, %v282, 0
      %v379 = vsel %vm308, %v283, 0
      %v382 = vsel %vm308, %v284, 0
      %v385 = vsel %vm308, %v285, 0
      %v388 = vsel %vm308, %v286, 0
      %v391 = vsel %vm308, %v287, 0
      %v394 = vsel %vm308, %v288, 0
      %v397 = vsel %vm308, %v289, 0
      %v400 = vsel %vm308, %v290, 0
      %v403 = vsel %vm308, %v291, 0
      %v406 = vsel %vm308, %v292, 0
      %v409 = vsel %vm308, %v293, 0
      %v412 = vsel %vm308, %v294, 0
      %v415 = vsel %vm308, %v295, 0
      %v418 = vsel %vm308, %v296, 0
      %v421 = vsel %vm308, %v297, 0
      %v424 = vsel %vm308, %v298, 0
      %v427 = vsel %vm308, %v299, 0
      %v430 = vsel %vm308, %v300, 0
      %v433 = vsel %vm308, %v301, 0
      %v436 = vsel %vm308, %v302, 0
      %v439 = vsel %vm308, %v303, 0
      %v442 = vsel %vm308, %v304, 0
      %v445 = vsel %vm308, %v305, 0
      %v448 = vsel %vm308, %v306, 0
      %v451 = vsel %vm308, %v307, 0
      %453 = vmatprep.subr.mxu0 0.0
      %454 = vmatpush1.msra.mxu0 0.0
      %455 = vmatprep.subr.mxu0 0.0
      %456 = vmatpush1.msra.mxu0 0.0
      %457 = vmatprep.subr.mxu0 0.0
      %458 = vmatpush1.msra.mxu0 0.0
      %459 = vmatprep.subr.mxu0 0.0
      %460 = vmatpush1.msra.mxu0 0.0
      %461 = vmatprep.subr.mxu0 0.0
      %462 = vmatpush1.msra.mxu0 0.0
      %463 = vmatprep.subr.mxu0 0.0
      %464 = vmatpush1.msra.mxu0 0.0
      %465 = vmatprep.subr.mxu0 0.0
      %466 = vmatpush1.msra.mxu0 0.0
      %467 = vmatprep.subr.mxu0 0.0
      %468 = vmatpush1.msra.mxu0 0.0
      %469 = vmatprep.subr.mxu0 0.0
      %470 = vmatpush1.msra.mxu0 %v259
      %471 = vmatprep.subr.mxu0 0.0
      %472 = vmatpush1.msra.mxu0 %v258
      %473 = vmatprep.subr.mxu0 0.0
      %474 = vmatpush1.msra.mxu0 %v257
      %475 = vmatprep.subr.mxu0 0.0
      %476 = vmatpush1.msra.mxu0 %v256
      %477 = vmatprep.subr.mxu0 0.0
      %478 = vmatpush1.msra.mxu0 %v255
      %479 = vmatprep.subr.mxu0 0.0
      %480 = vmatpush1.msra.mxu0 %v254
      %481 = vmatprep.subr.mxu0 0.0
      %482 = vmatpush1.msra.mxu0 %v253
      %483 = vmatprep.subr.mxu0 0.0
      %484 = vmatpush1.msra.mxu0 %v252
      %485 = vmatprep.subr.mxu0 0.0
      %486 = vmatpush2.msra.mxu0 0.0
      %487 = vmatprep.subr.mxu0 0.0
      %488 = vmatpush2.msra.mxu0 0.0
      %489 = vmatprep.subr.mxu0 0.0
      %490 = vmatpush2.msra.mxu0 0.0
      %491 = vmatprep.subr.mxu0 0.0
      %492 = vmatpush2.msra.mxu0 0.0
      %493 = vmatprep.subr.mxu0 0.0
      %494 = vmatpush2.msra.mxu0 0.0
      %495 = vmatprep.subr.mxu0 0.0
      %496 = vmatpush2.msra.mxu0 0.0
      %497 = vmatprep.subr.mxu0 0.0
      %498 = vmatpush2.msra.mxu0 0.0
      %499 = vmatprep.subr.mxu0 0.0
      %500 = vmatpush2.msra.mxu0 0.0
      %501 = vmatprep.subr.mxu0 0.0
      %502 = vmatpush2.msra.mxu0 0.0
      %503 = vmatprep.subr.mxu0 0.0
      %504 = vmatpush2.msra.mxu0 0.0
      %505 = vmatprep.subr.mxu0 0.0
      %506 = vmatpush2.msra.mxu0 0.0
      %507 = vmatprep.subr.mxu0 0.0
      %508 = vmatpush2.msra.mxu0 0.0
      %509 = vmatprep.subr.mxu0 0.0
      %510 = vmatpush2.msra.mxu0 0.0
      %511 = vmatprep.subr.mxu0 0.0
      %512 = vmatpush2.msra.mxu0 0.0
      %513 = vmatprep.subr.mxu0 0.0
      %514 = vmatpush2.msra.mxu0 0.0
      %515 = vmatprep.subr.mxu0 0.0
      %516 = vmatpush2.msra.mxu0 0.0
      %517 = vmatprep.mubr.f32.mxu0 0.0
      %518 = vmatmul.mubr.f32.gmra.mxu0 %v310
      %v519 = vpop.f32.mrf.mxu0
      %v520 = vadd.f32 0.0, %v519
      %v521 = vpop.f32.mrf.mxu0
      %522 = vmatprep.mubr.f32.mxu0 0.0
      %523 = vmatmul.mubr.f32.gmra.mxu0 %v313
      %v524 = vpop.f32.mrf.mxu0
      %v525 = vadd.f32 0.0, %v524
      %v526 = vpop.f32.mrf.mxu0
      %527 = vmatprep.mubr.f32.mxu0 0.0
      %528 = vmatmul.mubr.f32.gmra.mxu0 %v316
      %v529 = vpop.f32.mrf.mxu0
      %v530 = vadd.f32 0.0, %v529
      %v531 = vpop.f32.mrf.mxu0
      %532 = vmatprep.mubr.f32.mxu0 0.0
      %533 = vmatmul.mubr.f32.gmra.mxu0 %v319
      %v534 = vpop.f32.mrf.mxu0
      %v535 = vadd.f32 0.0, %v534
      %v536 = vpop.f32.mrf.mxu0
      %537 = vmatprep.mubr.f32.mxu0 0.0
      %538 = vmatmul.mubr.f32.gmra.mxu0 %v322
      %v539 = vpop.f32.mrf.mxu0
      %v540 = vadd.f32 0.0, %v539
      %v541 = vpop.f32.mrf.mxu0
      %542 = vmatprep.mubr.f32.mxu0 0.0
      %543 = vmatmul.mubr.f32.gmra.mxu0 %v325
      %v544 = vpop.f32.mrf.mxu0
      %v545 = vadd.f32 0.0, %v544
      %v546 = vpop.f32.mrf.mxu0
      %547 = vmatprep.mubr.f32.mxu0 0.0
      %548 = vmatmul.mubr.f32.gmra.mxu0 %v328
      %v549 = vpop.f32.mrf.mxu0
      %v550 = vadd.f32 0.0, %v549
      %v551 = vpop.f32.mrf.mxu0
      %552 = vmatprep.mubr.f32.mxu0 0.0
      %553 = vmatmul.mubr.f32.gmra.mxu0 %v331
      %v554 = vpop.f32.mrf.mxu0
      %v555 = vadd.f32 0.0, %v554
      %v556 = vpop.f32.mrf.mxu0
      %557 = vmatprep.mubr.f32.mxu0 0.0
      %558 = vmatmul.mubr.f32.gmra.mxu0 %v334
      %v559 = vpop.f32.mrf.mxu0
      %v560 = vadd.f32 0.0, %v559
      %v561 = vpop.f32.mrf.mxu0
      %562 = vmatprep.mubr.f32.mxu0 0.0
      %563 = vmatmul.mubr.f32.gmra.mxu0 %v337
      %v564 = vpop.f32.mrf.mxu0
      %v565 = vadd.f32 0.0, %v564
      %v566 = vpop.f32.mrf.mxu0
      %567 = vmatprep.mubr.f32.mxu0 0.0
      %568 = vmatmul.mubr.f32.gmra.mxu0 %v340
      %v569 = vpop.f32.mrf.mxu0
      %v570 = vadd.f32 0.0, %v569
      %v571 = vpop.f32.mrf.mxu0
      %572 = vmatprep.mubr.f32.mxu0 0.0
      %573 = vmatmul.mubr.f32.gmra.mxu0 %v343
      %v574 = vpop.f32.mrf.mxu0
      %v575 = vadd.f32 0.0, %v574
      %v576 = vpop.f32.mrf.mxu0
      %577 = vmatprep.mubr.f32.mxu0 0.0
      %578 = vmatmul.mubr.f32.gmra.mxu0 %v346
      %v579 = vpop.f32.mrf.mxu0
      %v580 = vadd.f32 0.0, %v579
      %v581 = vpop.f32.mrf.mxu0
      %582 = vmatprep.mubr.f32.mxu0 0.0
      %583 = vmatmul.mubr.f32.gmra.mxu0 %v349
      %v584 = vpop.f32.mrf.mxu0
      %v585 = vadd.f32 0.0, %v584
      %v586 = vpop.f32.mrf.mxu0
      %587 = vmatprep.mubr.f32.mxu0 0.0
      %588 = vmatmul.mubr.f32.gmra.mxu0 %v352
      %v589 = vpop.f32.mrf.mxu0
      %v590 = vadd.f32 0.0, %v589
      %v591 = vpop.f32.mrf.mxu0
      %592 = vmatprep.mubr.f32.mxu0 0.0
      %593 = vmatmul.mubr.f32.gmra.mxu0 %v355
      %v594 = vpop.f32.mrf.mxu0
      %v595 = vadd.f32 0.0, %v594
      %v596 = vpop.f32.mrf.mxu0
      %597 = vmatprep.mubr.f32.mxu0 0.0
      %598 = vmatmul.mubr.f32.gmra.mxu0 %v358
      %v599 = vpop.f32.mrf.mxu0
      %v600 = vadd.f32 0.0, %v599
      %v601 = vpop.f32.mrf.mxu0
      %602 = vmatprep.mubr.f32.mxu0 0.0
      %603 = vmatmul.mubr.f32.gmra.mxu0 %v361
      %v604 = vpop.f32.mrf.mxu0
      %v605 = vadd.f32 0.0, %v604
      %v606 = vpop.f32.mrf.mxu0
      %607 = vmatprep.mubr.f32.mxu0 0.0
      %608 = vmatmul.mubr.f32.gmra.mxu0 %v364
      %v609 = vpop.f32.mrf.mxu0
      %v610 = vadd.f32 0.0, %v609
      %v611 = vpop.f32.mrf.mxu0
      %612 = vmatprep.mubr.f32.mxu0 0.0
      %613 = vmatmul.mubr.f32.gmra.mxu0 %v367
      %v614 = vpop.f32.mrf.mxu0
      %v615 = vadd.f32 0.0, %v614
      %v616 = vpop.f32.mrf.mxu0
      %617 = vmatprep.mubr.f32.mxu0 0.0
      %618 = vmatmul.mubr.f32.gmra.mxu0 %v370
      %v619 = vpop.f32.mrf.mxu0
      %v620 = vadd.f32 0.0, %v619
      %v621 = vpop.f32.mrf.mxu0
      %622 = vmatprep.mubr.f32.mxu0 0.0
      %623 = vmatmul.mubr.f32.gmra.mxu0 %v373
      %v624 = vpop.f32.mrf.mxu0
      %v625 = vadd.f32 0.0, %v624
      %v626 = vpop.f32.mrf.mxu0
      %627 = vmatprep.mubr.f32.mxu0 0.0
      %628 = vmatmul.mubr.f32.gmra.mxu0 %v376
      %v629 = vpop.f32.mrf.mxu0
      %v630 = vadd.f32 0.0, %v629
      %v631 = vpop.f32.mrf.mxu0
      %632 = vmatprep.mubr.f32.mxu0 0.0
      %633 = vmatmul.mubr.f32.gmra.mxu0 %v379
      %v634 = vpop.f32.mrf.mxu0
      %v635 = vadd.f32 0.0, %v634
      %v636 = vpop.f32.mrf.mxu0
      %637 = vmatprep.mubr.f32.mxu0 0.0
      %638 = vmatmul.mubr.f32.gmra.mxu0 %v382
      %v639 = vpop.f32.mrf.mxu0
      %v640 = vadd.f32 0.0, %v639
      %v641 = vpop.f32.mrf.mxu0
      %642 = vmatprep.mubr.f32.mxu0 0.0
      %643 = vmatmul.mubr.f32.gmra.mxu0 %v385
      %v644 = vpop.f32.mrf.mxu0
      %v645 = vadd.f32 0.0, %v644
      %v646 = vpop.f32.mrf.mxu0
      %647 = vmatprep.mubr.f32.mxu0 0.0
      %648 = vmatmul.mubr.f32.gmra.mxu0 %v388
      %v649 = vpop.f32.mrf.mxu0
      %v650 = vadd.f32 0.0, %v649
      %v651 = vpop.f32.mrf.mxu0
      %652 = vmatprep.mubr.f32.mxu0 0.0
      %653 = vmatmul.mubr.f32.gmra.mxu0 %v391
      %v654 = vpop.f32.mrf.mxu0
      %v655 = vadd.f32 0.0, %v654
      %v656 = vpop.f32.mrf.mxu0
      %657 = vmatprep.mubr.f32.mxu0 0.0
      %658 = vmatmul.mubr.f32.gmra.mxu0 %v394
      %v659 = vpop.f32.mrf.mxu0
      %v660 = vadd.f32 0.0, %v659
      %v661 = vpop.f32.mrf.mxu0
      %662 = vmatprep.mubr.f32.mxu0 0.0
      %663 = vmatmul.mubr.f32.gmra.mxu0 %v397
      %v664 = vpop.f32.mrf.mxu0
      %v665 = vadd.f32 0.0, %v664
      %v666 = vpop.f32.mrf.mxu0
      %667 = vmatprep.mubr.f32.mxu0 0.0
      %668 = vmatmul.mubr.f32.gmra.mxu0 %v400
      %v669 = vpop.f32.mrf.mxu0
      %v670 = vadd.f32 0.0, %v669
      %v671 = vpop.f32.mrf.mxu0
      %672 = vmatprep.mubr.f32.mxu0 0.0
      %673 = vmatmul.mubr.f32.gmra.mxu0 %v403
      %v674 = vpop.f32.mrf.mxu0
      %v675 = vadd.f32 0.0, %v674
      %v676 = vpop.f32.mrf.mxu0
      %677 = vmatprep.mubr.f32.mxu0 0.0
      %678 = vmatmul.mubr.f32.gmra.mxu0 %v406
      %v679 = vpop.f32.mrf.mxu0
      %v680 = vadd.f32 0.0, %v679
      %v681 = vpop.f32.mrf.mxu0
      %682 = vmatprep.mubr.f32.mxu0 0.0
      %683 = vmatmul.mubr.f32.gmra.mxu0 %v409
      %v684 = vpop.f32.mrf.mxu0
      %v685 = vadd.f32 0.0, %v684
      %v686 = vpop.f32.mrf.mxu0
      %687 = vmatprep.mubr.f32.mxu0 0.0
      %688 = vmatmul.mubr.f32.gmra.mxu0 %v412
      %v689 = vpop.f32.mrf.mxu0
      %v690 = vadd.f32 0.0, %v689
      %v691 = vpop.f32.mrf.mxu0
      %692 = vmatprep.mubr.f32.mxu0 0.0
      %693 = vmatmul.mubr.f32.gmra.mxu0 %v415
      %v694 = vpop.f32.mrf.mxu0
      %v695 = vadd.f32 0.0, %v694
      %v696 = vpop.f32.mrf.mxu0
      %697 = vmatprep.mubr.f32.mxu0 0.0
      %698 = vmatmul.mubr.f32.gmra.mxu0 %v418
      %v699 = vpop.f32.mrf.mxu0
      %v700 = vadd.f32 0.0, %v699
      %v701 = vpop.f32.mrf.mxu0
      %702 = vmatprep.mubr.f32.mxu0 0.0
      %703 = vmatmul.mubr.f32.gmra.mxu0 %v421
      %v704 = vpop.f32.mrf.mxu0
      %v705 = vadd.f32 0.0, %v704
      %v706 = vpop.f32.mrf.mxu0
      %707 = vmatprep.mubr.f32.mxu0 0.0
      %708 = vmatmul.mubr.f32.gmra.mxu0 %v424
      %v709 = vpop.f32.mrf.mxu0
      %v710 = vadd.f32 0.0, %v709
      %v711 = vpop.f32.mrf.mxu0
      %712 = vmatprep.mubr.f32.mxu0 0.0
      %713 = vmatmul.mubr.f32.gmra.mxu0 %v427
      %v714 = vpop.f32.mrf.mxu0
      %v715 = vadd.f32 0.0, %v714
      %v716 = vpop.f32.mrf.mxu0
      %717 = vmatprep.mubr.f32.mxu0 0.0
      %718 = vmatmul.mubr.f32.gmra.mxu0 %v430
      %v719 = vpop.f32.mrf.mxu0
      %v720 = vadd.f32 0.0, %v719
      %v721 = vpop.f32.mrf.mxu0
      %722 = vmatprep.mubr.f32.mxu0 0.0
      %723 = vmatmul.mubr.f32.gmra.mxu0 %v433
      %v724 = vpop.f32.mrf.mxu0
      %v725 = vadd.f32 0.0, %v724
      %v726 = vpop.f32.mrf.mxu0
      %727 = vmatprep.mubr.f32.mxu0 0.0
      %728 = vmatmul.mubr.f32.gmra.mxu0 %v436
      %v729 = vpop.f32.mrf.mxu0
      %v730 = vadd.f32 0.0, %v729
      %v731 = vpop.f32.mrf.mxu0
      %732 = vmatprep.mubr.f32.mxu0 0.0
      %733 = vmatmul.mubr.f32.gmra.mxu0 %v439
      %v734 = vpop.f32.mrf.mxu0
      %v735 = vadd.f32 0.0, %v734
      %v736 = vpop.f32.mrf.mxu0
      %737 = vmatprep.mubr.f32.mxu0 0.0
      %738 = vmatmul.mubr.f32.gmra.mxu0 %v442
      %v739 = vpop.f32.mrf.mxu0
      %v740 = vadd.f32 0.0, %v739
      %v741 = vpop.f32.mrf.mxu0
      %742 = vmatprep.mubr.f32.mxu0 0.0
      %743 = vmatmul.mubr.f32.gmra.mxu0 %v445
      %v744 = vpop.f32.mrf.mxu0
      %v745 = vadd.f32 0.0, %v744
      %v746 = vpop.f32.mrf.mxu0
      %747 = vmatprep.mubr.f32.mxu0 0.0
      %748 = vmatmul.mubr.f32.gmra.mxu0 %v448
      %v749 = vpop.f32.mrf.mxu0
      %v750 = vadd.f32 0.0, %v749
      %v751 = vpop.f32.mrf.mxu0
      %752 = vmatprep.mubr.f32.mxu0 0.0
      %753 = vmatmul.mubr.f32.gmra.mxu0 %v451
      %v754 = vpop.f32.mrf.mxu0
      %v755 = vadd.f32 0.0, %v754
      %v756 = vpop.f32.mrf.mxu0
      %757 = vdwg.mxu0
      %766 = vrot.lane.b32.xlu0 %v560, 24
      %v767 = vpop.permute.xlu0 %766
      %768 = vrot.lane.b32.xlu0 %v565, 24
      %v769 = vpop.permute.xlu0 %768
      %770 = vrot.lane.b32.xlu0 %v570, 24
      %v771 = vpop.permute.xlu0 %770
      %772 = vrot.lane.b32.xlu0 %v575, 24
      %v773 = vpop.permute.xlu0 %772
      %774 = vrot.lane.b32.xlu0 %v580, 24
      %v775 = vpop.permute.xlu0 %774
      %776 = vrot.lane.b32.xlu0 %v585, 24
      %v777 = vpop.permute.xlu0 %776
      %778 = vrot.lane.b32.xlu0 %v590, 24
      %v779 = vpop.permute.xlu0 %778
      %780 = vrot.lane.b32.xlu0 %v595, 24
      %v781 = vpop.permute.xlu0 %780
      %798 = vrot.lane.b32.xlu0 %v600, 48
      %v799 = vpop.permute.xlu0 %798
      %800 = vrot.lane.b32.xlu0 %v605, 48
      %v801 = vpop.permute.xlu0 %800
      %802 = vrot.lane.b32.xlu0 %v610, 48
      %v803 = vpop.permute.xlu0 %802
      %804 = vrot.lane.b32.xlu0 %v615, 48
      %v805 = vpop.permute.xlu0 %804
      %806 = vrot.lane.b32.xlu0 %v620, 48
      %v807 = vpop.permute.xlu0 %806
      %808 = vrot.lane.b32.xlu0 %v625, 48
      %v809 = vpop.permute.xlu0 %808
      %810 = vrot.lane.b32.xlu0 %v630, 48
      %v811 = vpop.permute.xlu0 %810
      %812 = vrot.lane.b32.xlu0 %v635, 48
      %v813 = vpop.permute.xlu0 %812
      %830 = vrot.lane.b32.xlu0 %v640, 72
      %v831 = vpop.permute.xlu0 %830
      %832 = vrot.lane.b32.xlu0 %v645, 72
      %v833 = vpop.permute.xlu0 %832
      %834 = vrot.lane.b32.xlu0 %v650, 72
      %v835 = vpop.permute.xlu0 %834
      %836 = vrot.lane.b32.xlu0 %v655, 72
      %v837 = vpop.permute.xlu0 %836
      %838 = vrot.lane.b32.xlu0 %v660, 72
      %v839 = vpop.permute.xlu0 %838
      %840 = vrot.lane.b32.xlu0 %v665, 72
      %v841 = vpop.permute.xlu0 %840
      %842 = vrot.lane.b32.xlu0 %v670, 72
      %v843 = vpop.permute.xlu0 %842
      %844 = vrot.lane.b32.xlu0 %v675, 72
      %v845 = vpop.permute.xlu0 %844
      %862 = vrot.lane.b32.xlu0 %v680, 96
      %v863 = vpop.permute.xlu0 %862
      %864 = vrot.lane.b32.xlu0 %v685, 96
      %v865 = vpop.permute.xlu0 %864
      %866 = vrot.lane.b32.xlu0 %v690, 96
      %v867 = vpop.permute.xlu0 %866
      %868 = vrot.lane.b32.xlu0 %v695, 96
      %v869 = vpop.permute.xlu0 %868
      %870 = vrot.lane.b32.xlu0 %v700, 96
      %v871 = vpop.permute.xlu0 %870
      %872 = vrot.lane.b32.xlu0 %v705, 96
      %v873 = vpop.permute.xlu0 %872
      %874 = vrot.lane.b32.xlu0 %v710, 96
      %v875 = vpop.permute.xlu0 %874
      %876 = vrot.lane.b32.xlu0 %v715, 96
      %v877 = vpop.permute.xlu0 %876
      %894 = vrot.lane.b32.xlu0 %v720, 120
      %v895 = vpop.permute.xlu0 %894
      %896 = vrot.lane.b32.xlu0 %v725, 120
      %v897 = vpop.permute.xlu0 %896
      %898 = vrot.lane.b32.xlu0 %v730, 120
      %v899 = vpop.permute.xlu0 %898
      %900 = vrot.lane.b32.xlu0 %v735, 120
      %v901 = vpop.permute.xlu0 %900
      %902 = vrot.lane.b32.xlu0 %v740, 120
      %v903 = vpop.permute.xlu0 %902
      %904 = vrot.lane.b32.xlu0 %v745, 120
      %v905 = vpop.permute.xlu0 %904
      %906 = vrot.lane.b32.xlu0 %v750, 120
      %v907 = vpop.permute.xlu0 %906
      %908 = vrot.lane.b32.xlu0 %v755, 120
      %v909 = vpop.permute.xlu0 %908
      %vm918 = vcmask 195584
      %v919 = vsel %vm918, %v520, %v767
      %v920 = vsel %vm918, %v525, %v769
      %v921 = vsel %vm918, %v530, %v771
      %v922 = vsel %vm918, %v535, %v773
      %v923 = vsel %vm918, %v540, %v775
      %v924 = vsel %vm918, %v545, %v777
      %v925 = vsel %vm918, %v550, %v779
      %v926 = vsel %vm918, %v555, %v781
      %vm927 = vcmask 392192
      %v928 = vsel %vm927, %v919, %v799
      %v929 = vsel %vm927, %v920, %v801
      %v930 = vsel %vm927, %v921, %v803
      %v931 = vsel %vm927, %v922, %v805
      %v932 = vsel %vm927, %v923, %v807
      %v933 = vsel %vm927, %v924, %v809
      %v934 = vsel %vm927, %v925, %v811
      %v935 = vsel %vm927, %v926, %v813
      %vm936 = vcmask 588800
      %v937 = vsel %vm936, %v928, %v831
      %v938 = vsel %vm936, %v929, %v833
      %v939 = vsel %vm936, %v930, %v835
      %v940 = vsel %vm936, %v931, %v837
      %v941 = vsel %vm936, %v932, %v839
      %v942 = vsel %vm936, %v933, %v841
      %v943 = vsel %vm936, %v934, %v843
      %v944 = vsel %vm936, %v935, %v845
      %vm945 = vcmask 785408
      %v946 = vsel %vm945, %v937, %v863
      %v947 = vsel %vm945, %v938, %v865
      %v948 = vsel %vm945, %v939, %v867
      %v949 = vsel %vm945, %v940, %v869
      %v950 = vsel %vm945, %v941, %v871
      %v951 = vsel %vm945, %v942, %v873
      %v952 = vsel %vm945, %v943, %v875
      %v953 = vsel %vm945, %v944, %v877
      %vm954 = vcmask 982016
      %v955 = vsel %vm954, %v946, %v895
      %v956 = vsel %vm954, %v947, %v897
      %v957 = vsel %vm954, %v948, %v899
      %v958 = vsel %vm954, %v949, %v901
      %v959 = vsel %vm954, %v950, %v903
      %v960 = vsel %vm954, %v951, %v905
      %v961 = vsel %vm954, %v952, %v907
      %v962 = vsel %vm954, %v953, %v909
      %v963 = vld [vmem:[%s2] sm:$0xff]
      %v964 = vld [vmem:[%s2 + $0x8] sm:$0xff]
      %v965 = vld [vmem:[%s2 + $0x10] sm:$0xff]
      %v966 = vld [vmem:[%s2 + $0x18] sm:$0xff]
      %v967 = vld [vmem:[%s2 + $0x20] sm:$0xff]
      %v968 = vld [vmem:[%s2 + $0x28] sm:$0xff]
      %v969 = vld [vmem:[%s2 + $0x30] sm:$0xff]
      %v970 = vld [vmem:[%s2 + $0x38] sm:$0xff]
      %v971 = vld [vmem:[%s2 + $0x40] sm:$0xff]
      %v972 = vld [vmem:[%s2 + $0x48] sm:$0xff]
      %v973 = vld [vmem:[%s2 + $0x50] sm:$0xff]
      %v974 = vld [vmem:[%s2 + $0x58] sm:$0xff]
      %v975 = vld [vmem:[%s2 + $0x60] sm:$0xff]
      %v976 = vld [vmem:[%s2 + $0x68] sm:$0xff]
      %v977 = vld [vmem:[%s2 + $0x70] sm:$0xff]
      %v978 = vld [vmem:[%s2 + $0x78] sm:$0xff]
      %v979 = vld [vmem:[%s2 + $0x80] sm:$0xff]
      %v980 = vld [vmem:[%s2 + $0x88] sm:$0xff]
      %v981 = vld [vmem:[%s3] sm:$0x1]
      %v983 = vlaneseq
      %v984 = vshrl.u32 %v983, 7
      %v985 = vsub.s32 0, %v984
      %v986 = vrot.slane %v981, %v985
      %vm988 = vcmask 130048
      %v989 = vsel %vm988, %v895, 0
      %v991 = vsel %vm988, %v897, 0
      %v993 = vsel %vm988, %v899, 0
      %v995 = vsel %vm988, %v901, 0
      %v997 = vsel %vm988, %v903, 0
      %v999 = vsel %vm988, %v905, 0
      %v1001 = vsel %vm988, %v907, 0
      %v1003 = vsel %vm988, %v909, 0
      %1005 = vmatprep.subr.mxu0 0.0
      %1006 = vmatpush1.msra.mxu0 %v978
      %1007 = vmatprep.subr.mxu0 0.0
      %1008 = vmatpush1.msra.mxu0 %v977
      %1009 = vmatprep.subr.mxu0 0.0
      %1010 = vmatpush1.msra.mxu0 %v976
      %1011 = vmatprep.subr.mxu0 0.0
      %1012 = vmatpush1.msra.mxu0 %v975
      %1013 = vmatprep.subr.mxu0 0.0
      %1014 = vmatpush1.msra.mxu0 %v974
      %1015 = vmatprep.subr.mxu0 0.0
      %1016 = vmatpush1.msra.mxu0 %v973
      %1017 = vmatprep.subr.mxu0 0.0
      %1018 = vmatpush1.msra.mxu0 %v972
      %1019 = vmatprep.subr.mxu0 0.0
      %1020 = vmatpush1.msra.mxu0 %v971
      %1021 = vmatprep.subr.mxu0 0.0
      %1022 = vmatpush1.msra.mxu0 %v970
      %1023 = vmatprep.subr.mxu0 0.0
      %1024 = vmatpush1.msra.mxu0 %v969
      %1025 = vmatprep.subr.mxu0 0.0
      %1026 = vmatpush1.msra.mxu0 %v968
      %1027 = vmatprep.subr.mxu0 0.0
      %1028 = vmatpush1.msra.mxu0 %v967
      %1029 = vmatprep.subr.mxu0 0.0
      %1030 = vmatpush1.msra.mxu0 %v966
      %1031 = vmatprep.subr.mxu0 0.0
      %1032 = vmatpush1.msra.mxu0 %v965
      %1033 = vmatprep.subr.mxu0 0.0
      %1034 = vmatpush1.msra.mxu0 %v964
      %1035 = vmatprep.subr.mxu0 0.0
      %1036 = vmatpush1.msra.mxu0 %v963
      %1037 = vmatprep.subr.mxu0 0.0
      %1038 = vmatpush2.msra.mxu0 0.0
      %1039 = vmatprep.subr.mxu0 0.0
      %1040 = vmatpush2.msra.mxu0 0.0
      %1041 = vmatprep.subr.mxu0 0.0
      %1042 = vmatpush2.msra.mxu0 0.0
      %1043 = vmatprep.subr.mxu0 0.0
      %1044 = vmatpush2.msra.mxu0 0.0
      %1045 = vmatprep.subr.mxu0 0.0
      %1046 = vmatpush2.msra.mxu0 0.0
      %1047 = vmatprep.subr.mxu0 0.0
      %1048 = vmatpush2.msra.mxu0 0.0
      %1049 = vmatprep.subr.mxu0 0.0
      %1050 = vmatpush2.msra.mxu0 0.0
      %1051 = vmatprep.subr.mxu0 0.0
      %1052 = vmatpush2.msra.mxu0 0.0
      %1053 = vmatprep.subr.mxu0 0.0
      %1054 = vmatpush2.msra.mxu0 0.0
      %1055 = vmatprep.subr.mxu0 0.0
      %1056 = vmatpush2.msra.mxu0 0.0
      %1057 = vmatprep.subr.mxu0 0.0
      %1058 = vmatpush2.msra.mxu0 0.0
      %1059 = vmatprep.subr.mxu0 0.0
      %1060 = vmatpush2.msra.mxu0 0.0
      %1061 = vmatprep.subr.mxu0 0.0
      %1062 = vmatpush2.msra.mxu0 0.0
      %1063 = vmatprep.subr.mxu0 0.0
      %1064 = vmatpush2.msra.mxu0 0.0
      %1065 = vmatprep.subr.mxu0 0.0
      %1066 = vmatpush2.msra.mxu0 %v980
      %1067 = vmatprep.subr.mxu0 0.0
      %1068 = vmatpush2.msra.mxu0 %v979
      %1069 = vmatprep.mubr.f32.mxu0 %v989
      %1070 = vmatmul.mubr.f32.gmra.mxu0 %v955
      %v1071 = vpop.f32.mrf.mxu0
      %v1072 = vadd.f32 %v986, %v1071
      %v1073 = vpop.f32.mrf.mxu0
      %1074 = vmatprep.mubr.f32.mxu0 %v991
      %1075 = vmatmul.mubr.f32.gmra.mxu0 %v956
      %v1076 = vpop.f32.mrf.mxu0
      %v1077 = vadd.f32 %v986, %v1076
      %v1078 = vpop.f32.mrf.mxu0
      %1079 = vmatprep.mubr.f32.mxu0 %v993
      %1080 = vmatmul.mubr.f32.gmra.mxu0 %v957
      %v1081 = vpop.f32.mrf.mxu0
      %v1082 = vadd.f32 %v986, %v1081
      %v1083 = vpop.f32.mrf.mxu0
      %1084 = vmatprep.mubr.f32.mxu0 %v995
      %1085 = vmatmul.mubr.f32.gmra.mxu0 %v958
      %v1086 = vpop.f32.mrf.mxu0
      %v1087 = vadd.f32 %v986, %v1086
      %v1088 = vpop.f32.mrf.mxu0
      %1089 = vmatprep.mubr.f32.mxu0 %v997
      %1090 = vmatmul.mubr.f32.gmra.mxu0 %v959
      %v1091 = vpop.f32.mrf.mxu0
      %v1092 = vadd.f32 %v986, %v1091
      %v1093 = vpop.f32.mrf.mxu0
      %1094 = vmatprep.mubr.f32.mxu0 %v999
      %1095 = vmatmul.mubr.f32.gmra.mxu0 %v960
      %v1096 = vpop.f32.mrf.mxu0
      %v1097 = vadd.f32 %v986, %v1096
      %v1098 = vpop.f32.mrf.mxu0
      %1099 = vmatprep.mubr.f32.mxu0 %v1001
      %1100 = vmatmul.mubr.f32.gmra.mxu0 %v961
      %v1101 = vpop.f32.mrf.mxu0
      %v1102 = vadd.f32 %v986, %v1101
      %v1103 = vpop.f32.mrf.mxu0
      %1104 = vmatprep.mubr.f32.mxu0 %v1003
      %1105 = vmatmul.mubr.f32.gmra.mxu0 %v962
      %v1106 = vpop.f32.mrf.mxu0
      %v1107 = vadd.f32 %v986, %v1106
      %v1108 = vpop.f32.mrf.mxu0
      %1109 = vdwg.mxu0
      %v1110 = vmax.f32 %v1072, 0.0
      %v1111 = vmax.f32 %v1077, 0.0
      %v1112 = vmax.f32 %v1082, 0.0
      %v1113 = vmax.f32 %v1087, 0.0
      %v1114 = vmax.f32 %v1092, 0.0
      %v1115 = vmax.f32 %v1097, 0.0
      %v1116 = vmax.f32 %v1102, 0.0
      %v1117 = vmax.f32 %v1107, 0.0
      %v1118 = vld [vmem:[%s4] sm:$0xff]
      %v1119 = vld [vmem:[%s4 + $0x8] sm:$0xff]
      %v1120 = vld [vmem:[%s4 + $0x10] sm:$0xff]
      %v1121 = vld [vmem:[%s4 + $0x18] sm:$0xff]
      %v1122 = vld [vmem:[%s4 + $0x20] sm:$0xff]
      %v1123 = vld [vmem:[%s4 + $0x28] sm:$0xff]
      %v1124 = vld [vmem:[%s4 + $0x30] sm:$0xff]
      %v1125 = vld [vmem:[%s4 + $0x38] sm:$0xff]
      %v1126 = vld [vmem:[%s5] sm:$0x1]
      %v1128 = vlaneseq
      %v1129 = vshrl.u32 %v1128, 7
      %v1130 = vsub.s32 0, %v1129
      %v1131 = vrot.slane %v1126, %v1130
      %v1134 = vsel %vm308, %v1110, 0
      %v1137 = vsel %vm308, %v1111, 0
      %v1140 = vsel %vm308, %v1112, 0
      %v1143 = vsel %vm308, %v1113, 0
      %v1146 = vsel %vm308, %v1114, 0
      %v1149 = vsel %vm308, %v1115, 0
      %v1152 = vsel %vm308, %v1116, 0
      %v1155 = vsel %vm308, %v1117, 0
      %1157 = vmatprep.subr.mxu0 0.0
      %1158 = vmatpush1.msra.mxu0 0.0
      %1159 = vmatprep.subr.mxu0 0.0
      %1160 = vmatpush1.msra.mxu0 0.0
      %1161 = vmatprep.subr.mxu0 0.0
      %1162 = vmatpush1.msra.mxu0 0.0
      %1163 = vmatprep.subr.mxu0 0.0
      %1164 = vmatpush1.msra.mxu0 0.0
      %1165 = vmatprep.subr.mxu0 0.0
      %1166 = vmatpush1.msra.mxu0 0.0
      %1167 = vmatprep.subr.mxu0 0.0
      %1168 = vmatpush1.msra.mxu0 0.0
      %1169 = vmatprep.subr.mxu0 0.0
      %1170 = vmatpush1.msra.mxu0 0.0
      %1171 = vmatprep.subr.mxu0 0.0
      %1172 = vmatpush1.msra.mxu0 0.0
      %1173 = vmatprep.subr.mxu0 0.0
      %1174 = vmatpush1.msra.mxu0 %v1125
      %1175 = vmatprep.subr.mxu0 0.0
      %1176 = vmatpush1.msra.mxu0 %v1124
      %1177 = vmatprep.subr.mxu0 0.0
      %1178 = vmatpush1.msra.mxu0 %v1123
      %1179 = vmatprep.subr.mxu0 0.0
      %1180 = vmatpush1.msra.mxu0 %v1122
      %1181 = vmatprep.subr.mxu0 0.0
      %1182 = vmatpush1.msra.mxu0 %v1121
      %1183 = vmatprep.subr.mxu0 0.0
      %1184 = vmatpush1.msra.mxu0 %v1120
      %1185 = vmatprep.subr.mxu0 0.0
      %1186 = vmatpush1.msra.mxu0 %v1119
      %1187 = vmatprep.subr.mxu0 0.0
      %1188 = vmatpush1.msra.mxu0 %v1118
      %1189 = vmatprep.subr.mxu0 0.0
      %1190 = vmatpush2.msra.mxu0 0.0
      %1191 = vmatprep.subr.mxu0 0.0
      %1192 = vmatpush2.msra.mxu0 0.0
      %1193 = vmatprep.subr.mxu0 0.0
      %1194 = vmatpush2.msra.mxu0 0.0
      %1195 = vmatprep.subr.mxu0 0.0
      %1196 = vmatpush2.msra.mxu0 0.0
      %1197 = vmatprep.subr.mxu0 0.0
      %1198 = vmatpush2.msra.mxu0 0.0
      %1199 = vmatprep.subr.mxu0 0.0
      %1200 = vmatpush2.msra.mxu0 0.0
      %1201 = vmatprep.subr.mxu0 0.0
      %1202 = vmatpush2.msra.mxu0 0.0
      %1203 = vmatprep.subr.mxu0 0.0
      %1204 = vmatpush2.msra.mxu0 0.0
      %1205 = vmatprep.subr.mxu0 0.0
      %1206 = vmatpush2.msra.mxu0 0.0
      %1207 = vmatprep.subr.mxu0 0.0
      %1208 = vmatpush2.msra.mxu0 0.0
      %1209 = vmatprep.subr.mxu0 0.0
      %1210 = vmatpush2.msra.mxu0 0.0
      %1211 = vmatprep.subr.mxu0 0.0
      %1212 = vmatpush2.msra.mxu0 0.0
      %1213 = vmatprep.subr.mxu0 0.0
      %1214 = vmatpush2.msra.mxu0 0.0
      %1215 = vmatprep.subr.mxu0 0.0
      %1216 = vmatpush2.msra.mxu0 0.0
      %1217 = vmatprep.subr.mxu0 0.0
      %1218 = vmatpush2.msra.mxu0 0.0
      %1219 = vmatprep.subr.mxu0 0.0
      %1220 = vmatpush2.msra.mxu0 0.0
      %1221 = vmatprep.mubr.f32.mxu0 0.0
      %1222 = vmatmul.mubr.f32.gmra.mxu0 %v1134
      %v1223 = vpop.f32.mrf.mxu0
      %v1224 = vadd.f32 %v1131, %v1223
      %v1225 = vpop.f32.mrf.mxu0
      %1226 = vmatprep.mubr.f32.mxu0 0.0
      %1227 = vmatmul.mubr.f32.gmra.mxu0 %v1137
      %v1228 = vpop.f32.mrf.mxu0
      %v1229 = vadd.f32 %v1131, %v1228
      %v1230 = vpop.f32.mrf.mxu0
      %1231 = vmatprep.mubr.f32.mxu0 0.0
      %1232 = vmatmul.mubr.f32.gmra.mxu0 %v1140
      %v1233 = vpop.f32.mrf.mxu0
      %v1234 = vadd.f32 %v1131, %v1233
      %v1235 = vpop.f32.mrf.mxu0
      %1236 = vmatprep.mubr.f32.mxu0 0.0
      %1237 = vmatmul.mubr.f32.gmra.mxu0 %v1143
      %v1238 = vpop.f32.mrf.mxu0
      %v1239 = vadd.f32 %v1131, %v1238
      %v1240 = vpop.f32.mrf.mxu0
      %1241 = vmatprep.mubr.f32.mxu0 0.0
      %1242 = vmatmul.mubr.f32.gmra.mxu0 %v1146
      %v1243 = vpop.f32.mrf.mxu0
      %v1244 = vadd.f32 %v1131, %v1243
      %v1245 = vpop.f32.mrf.mxu0
      %1246 = vmatprep.mubr.f32.mxu0 0.0
      %1247 = vmatmul.mubr.f32.gmra.mxu0 %v1149
      %v1248 = vpop.f32.mrf.mxu0
      %v1249 = vadd.f32 %v1131, %v1248
      %v1250 = vpop.f32.mrf.mxu0
      %1251 = vmatprep.mubr.f32.mxu0 0.0
      %1252 = vmatmul.mubr.f32.gmra.mxu0 %v1152
      %v1253 = vpop.f32.mrf.mxu0
      %v1254 = vadd.f32 %v1131, %v1253
      %v1255 = vpop.f32.mrf.mxu0
      %1256 = vmatprep.mubr.f32.mxu0 0.0
      %1257 = vmatmul.mubr.f32.gmra.mxu0 %v1155
      %v1258 = vpop.f32.mrf.mxu0
      %v1259 = vadd.f32 %v1131, %v1258
      %v1260 = vpop.f32.mrf.mxu0
      %1261 = vdwg.mxu0
      %vm1262 = vcmask 48128
      %1263 = vst.msk [vmem:[%s251] sm:$0xff] %vm1262, %v1224
      %1264 = vst.msk [vmem:[%s251 + $0x8] sm:$0xff] %vm1262, %v1229
      %1265 = vst.msk [vmem:[%s251 + $0x10] sm:$0xff] %vm1262, %v1234
      %1266 = vst.msk [vmem:[%s251 + $0x18] sm:$0xff] %vm1262, %v1239
      %1267 = vst.msk [vmem:[%s251 + $0x20] sm:$0xff] %vm1262, %v1244
      %1268 = vst.msk [vmem:[%s251 + $0x28] sm:$0xff] %vm1262, %v1249
      %1269 = vst.msk [vmem:[%s251 + $0x30] sm:$0xff] %vm1262, %v1254
      %1270 = vst.msk [vmem:[%s251 + $0x38] sm:$0xff] %vm1262, %v1259
      %p1271 = scmp.lt.s32.totalorder %s17, 7
      %s1272 = scalar_select %p1271, %s17, 7
      %s1273 = smul.addr %s1272, 8
      %s1274 = smul.addr %s1273, 8
      %s1275 = scalar_lea.vmem %s6, %s1274
      // Predicated region
      $region45: #{tpu_custom_call.1} parent=43 // pred_check
        %p1276 = pneg %p166
      $region46: #{tpu_custom_call.1} parent=43 // pred_check_branch
        %1278 = sbr.rel (%p1276) target = $region48
      $region47: #{tpu_custom_call.1} parent=43 // pred_region
        _
      $region48: #{tpu_custom_call.1} parent=43 // pred_fallthru
        _
    $region44: #{tpu_custom_call.1} parent=5 // pred_fallthru
      _
    %p1279 = scmp.le.s32.totalorder 2, %s12
    // Predicated region
    $region49: #{tpu_custom_call.1} parent=5 // pred_check
      %p1280 = pneg %p1279
    $region50: #{tpu_custom_call.1} parent=5 // pred_check_branch
      %1282 = sbr.rel (%p1280) target = $region52
    $region51: #{tpu_custom_call.1} parent=5 // pred_region
      %s1283 = ssub.s32 %s12, 2
      // Predicated region
      $region53: #{tpu_custom_call.1} parent=51 // pred_check
        %p1284 = pneg %p172
      $region54: #{tpu_custom_call.1} parent=51 // pred_check_branch
        %1286 = sbr.rel (%p1284) target = $region56
      $region55: #{tpu_custom_call.1} parent=51 // pred_region
        %p1287 = scmp.lt.s32.totalorder %s18, 7
        %s1288 = scalar_select %p1287, %s18, 7
        %s1289 = smul.addr %s1288, 8
        %s1290 = smul.addr %s1289, 8
        %s1291 = scalar_lea.vmem %s6, %s1290
      $region56: #{tpu_custom_call.1} parent=51 // pred_fallthru
        _
    $region52: #{tpu_custom_call.1} parent=5 // pred_fallthru
      _
  $region6: #{tpu_custom_call.1} parent=0 // loop_footer
    %s16 = sadd.s32 1, %s12
  $region7: #{tpu_custom_call.1} parent=0 // loop_footer_branch
    %11 = sbr.rel target = $region3
  $region8: #{tpu_custom_call.1} parent=0 // loop_exit
    _

</llo_original>
